<compile_context>
chip_gen: v7x
topology: tpu7x:2x2x1
jax: 0.10.0
libtpu: 0.0.40
codegen_flags: <defaults>
</compile_context>

<pallas_src>
import jax
import jax.numpy as jnp
from jax.experimental import pallas as pl
from jax.experimental.pallas import tpu as pltpu  # noqa: F401  (TPU backend import)

OUT_SHAPE = (1, 2, 2)


def _uniform_from_bits_kernel(bits_ref, out_ref):
    """Convert raw uint32 random words to uniform float32 in [0, 1).

    Uses the top 24 bits so the result is exactly representable in f32 and
    uniform on [0, 1), matching torch.rand semantics (distributionally; the
    RNG stream itself cannot bit-match PyTorch).
    """
    bits = bits_ref[...]                                   # uint32, logical shift below
    u = (bits >> jnp.uint32(8)).astype(jnp.float32) * jnp.float32(1.0 / (1 << 24))
    out_ref[...] = u


@jax.jit
def model_forward(key: jax.Array) -> jax.Array:
    """Equivalent of model().forward(): returns x6 = rand(1, 2, 2).

    x1..x5 in the PyTorch module are dead values (never used in the output),
    so only the final rand_like(x1) draw is materialized.
    """
    # Raw random bits for the output elements (pure JAX; portable everywhere).
    bits = jax.random.bits(key, OUT_SHAPE, dtype=jnp.uint32)

    return pl.pallas_call(
        _uniform_from_bits_kernel,
        out_shape=jax.ShapeDtypeStruct(OUT_SHAPE, jnp.float32),
        # Block shape defaults to the full (1, 2, 2) array -> single grid-less
        # invocation, whole arrays resident in VMEM.
        cost_estimate=pl.CostEstimate(flops=8, transcendentals=0, bytes_accessed=32),
    )(bits)


if __name__ == "__main__":
    # Deterministic seed; forward() itself takes no tensor inputs.
    key = jax.random.PRNGKey(0)

    out = jax.block_until_ready(model_forward(key))

    assert out.shape == (1, 2, 2), out.shape
    assert out.dtype == jnp.float32, out.dtype
    assert bool(jnp.all(out >= 0.0)) and bool(jnp.all(out < 1.0)), out

    print("KERNEL_OK")
</pallas_src>

<mosaic_0001>
module attributes {stable_mosaic.version = 11 : i64} {
  func.func @_uniform_from_bits_kernel(%arg0: memref<1x2x2xi32, #tpu.memory_space<vmem>>, %arg1: memref<1x2x2xf32, #tpu.memory_space<vmem>>) attributes {dimension_semantics = [], scalar_prefetch = 0 : i64, scratch_operands = 0 : i64, tpu.core_type = #tpu.core_type<tc>} {
    %c0 = arith.constant 0 : index
    %c0_0 = arith.constant 0 : index
    %c0_1 = arith.constant 0 : index
    %0 = vector.load %arg0[%c0, %c0_0, %c0_1] : memref<1x2x2xi32, #tpu.memory_space<vmem>>, vector<1x2x2xi32>
    %c8_i32 = arith.constant 8 : i32
    %1 = vector.broadcast %c8_i32 : i32 to vector<1x2x2xi32>
    %2 = arith.shrui %0, %1 : vector<1x2x2xi32>
    %3 = arith.uitofp %2 : vector<1x2x2xi32> to vector<1x2x2xf32>
    %cst = arith.constant 5.96046448E-8 : f32
    %4 = vector.broadcast %cst : f32 to vector<1x2x2xf32>
    %5 = arith.mulf %3, %4 : vector<1x2x2xf32>
    %c0_2 = arith.constant 0 : index
    %c0_3 = arith.constant 0 : index
    %c0_4 = arith.constant 0 : index
    %6 = vector.load %arg1[%c0_2, %c0_3, %c0_4] : memref<1x2x2xf32, #tpu.memory_space<vmem>>, vector<1x2x2xf32>
    tpu.vector_store %arg1[%c0_2, %c0_3, %c0_4], %5 {strides = array<i32>} : memref<1x2x2xf32, #tpu.memory_space<vmem>>, vector<1x2x2xf32>,
    return
  }
}

</mosaic_0001>

<llo_original>
// kernel: model_forward.1
$region0: #{model_forward.1}
  #allocation0 [shape = 'u32[]', space=smem, size = 0x4, offset = 0x4, fixed_abs, tag = 'smem constant byte address 0x4 - core index']
  #allocation1 [shape = 'u32[144,128]{1,0:T(1,128)}', space=vmem, size = 0x12000, scoped, tag = 'internal scratch']
  %s0 = inlined_call_operand.vmem [shape: u32[1,2,2], index: 0, kind: input, shape index: {}]
  %s1 = inlined_call_operand.hbm [shape: f32[1,2,2], index: 1, kind: output, shape index: {}]
  %s2 = sld [smem:[#allocation0]]
  $region14: #{model_forward.1} parent=0
    _
  %s4 = ssub.s32 1, %s2
  %s5 = scalar_select 0, %s4, %s2
  $region1: #{model_forward.1} parent=0
    #allocation2 [shape = 'u8[1024]{0}', space=vmem, size = 0x400, scoped, tag = 'output window, operand 0, single buffered']
    #allocation3 [shape = 's32[1]{0}', space=sflag, size = 0x4, scoped, tag = 'scoped memory for model_forward.1']
    %6 = vsyncpa [#allocation3], 0
    // Predicated region
    $region2: #{model_forward.1} parent=1 // pred_check
      _
    $region3: #{model_forward.1} parent=1 // pred_check_branch
      %8 = sbr.rel (0) target = $region5
    $region4: #{model_forward.1} parent=1 // pred_region
      _
    $region5: #{model_forward.1} parent=1 // pred_fallthru
      _
    %v9 = vld [vmem:[%s0] sm:$0x3]
    %v10 = vshrl.u32 %v9, 8
    %v11 = vshrl.u32 %v10, 16
    %v12 = vand.u32 %v10, 65535
    %v13 = vcvt.s32.f32 %v11
    %v14 = vmul.f32 %v13, 65536.0
    %v15 = vcvt.s32.f32 %v12
    %v16 = vadd.f32 %v14, %v15
    %v17 = vmul.f32 %v16, 5.9604645e-08
    %vm18 = vcmask 9216
    %19 = vst.msk [vmem:[#allocation2] sm:$0x3] %vm18, %v17
    // Predicated region
    $region6: #{model_forward.1} parent=1 // pred_check
      _
    $region7: #{model_forward.1} parent=1 // pred_check_branch
      %21 = sbr.rel (0) target = $region9
    $region8: #{model_forward.1} parent=1 // pred_region
      %s23 = ssub.s32 32, 32
      %24 = vsyncadd [#allocation3], %s23
      %s26 = sshll.u32 [#allocation2], 4
      %s27 = int_to_ptr.vmem [resolvable:$true] %s26
      %29 = dma.vmem_to_hbm [thread:$0]  %s27, 32, %s1, [#allocation3]
    $region9: #{model_forward.1} parent=1 // pred_fallthru
      _
    // Predicated region
    $region10: #{model_forward.1} parent=1 // pred_check
      _
    $region11: #{model_forward.1} parent=1 // pred_check_branch
      %31 = sbr.rel (0) target = $region13
    $region12: #{model_forward.1} parent=1 // pred_region
      %32 = dma.done [#allocation3], 32
    $region13: #{model_forward.1} parent=1 // pred_fallthru
      _
    %33 = vsyncpa [#allocation3], 1

</llo_original>
